<compile_context>
chip_gen: v7x
topology: tpu7x:2x2x1
jax: 0.10.0
libtpu: 0.0.40
codegen_flags: <defaults>
</compile_context>

<pallas_src>
import jax
import jax.numpy as jnp
from jax.experimental import pallas as pl
from jax.experimental.pallas import tpu as pltpu

_TARGET_TILE_BYTES = 4 * 1024 * 1024    # ~4 MiB per pipeline buffer
_SMALL_ELEMS = 1024                     # below this, skip the Pallas launch
_VMEM_LIMIT_BYTES = 32 * 1024 * 1024    # safe on v5e/v6e (128 MiB) and v7x (64 MiB)


def _add_one_kernel(x_ref, o_ref):
    # Elementwise hot path: one VMEM tile, a single VPU add, full-width stores.
    o_ref[...] = x_ref[...] + jnp.asarray(1, dtype=o_ref.dtype)


def _choose_lane_width(total):
    """Largest lane-dense width (multiple of 128) that exactly divides `total`."""
    for c in (4096, 2048, 1024, 512, 256, 128):
        if total % c == 0:
            return c
    return None


def _tile_rows(rows, cols, itemsize):
    """Rows per grid step: ~4 MiB per buffer, multiple of 8, capped at `rows`."""
    r = _TARGET_TILE_BYTES // max(1, cols * itemsize)
    r = max(8, (r // 8) * 8)
    return min(rows, r)


def _pallas_add_one_2d(x2d, alias_input=False):
    rows, cols = x2d.shape
    tr = _tile_rows(rows, cols, x2d.dtype.itemsize)
    grid = (pl.cdiv(rows, tr),)
    # Optional in-place update: only beneficial when the caller donates the
    # input buffer at the jit boundary (otherwise XLA inserts a defensive copy).
    extra = {"input_output_aliases": {0: 0}} if alias_input else {}
    return pl.pallas_call(
        _add_one_kernel,
        out_shape=jax.ShapeDtypeStruct((rows, cols), x2d.dtype),
        grid=grid,
        in_specs=[pl.BlockSpec((tr, cols), lambda i: (i, 0))],
        out_specs=pl.BlockSpec((tr, cols), lambda i: (i, 0)),
        compiler_params=pltpu.CompilerParams(
            dimension_semantics=("parallel",),   # both TCs drive HBM on v7x
            vmem_limit_bytes=_VMEM_LIMIT_BYTES,
        ),
        **extra,
    )(x2d)


def tudui_forward(x, alias_input=False):
    """output = input + 1, computed in a Pallas TPU kernel for non-trivial sizes."""
    x = jnp.asarray(x)
    orig_shape = x.shape
    total = x.size

    # Tiny inputs (the module's actual usage is a scalar): launch overhead
    # (~0.35 us/step + custom-call dispatch) dwarfs the work -> plain XLA add.
    if total <= _SMALL_ELEMS:
        return x + jnp.asarray(1, dtype=x.dtype)

    # Lane-dense slab: flatten fully and fold into (rows, C) with C a multiple
    # of 128 so every vreg is fully populated and stores are unmasked.
    cols = _choose_lane_width(total)
    if cols is not None:
        x2d = x.reshape(total // cols, cols)
    elif x.ndim >= 2:
        # Fallback (total not a multiple of 128): keep the original trailing
        # dim as the lane axis; block spans the full lane dim so no padding.
        x2d = x.reshape(-1, orig_shape[-1])
    else:
        x2d = x.reshape(1, total)

    out2d = _pallas_add_one_2d(x2d, alias_input=alias_input)
    return out2d.reshape(orig_shape)


if __name__ == "__main__":
    key = jax.random.PRNGKey(0)
    k1, k2, k3 = jax.random.split(key, 3)

    # Case 1: exactly the module's usage — scalar tensor(1.0) -> 2.0 (fast path).
    out_scalar = jax.block_until_ready(tudui_forward(jnp.float32(1.0)))
    assert out_scalar.shape == ()
    assert jnp.allclose(out_scalar, 2.0)

    # Case 2: small NCHW tensor -> Pallas path, single lane-dense tile.
    x = jax.random.normal(k1, (2, 4, 16, 16), dtype=jnp.float32)
    out = jax.block_until_ready(tudui_forward(x))
    assert out.shape == x.shape
    assert jnp.allclose(out, x + 1.0)

    # Case 3: larger f32 slab -> Pallas path, multi-tile pipelined grid (grid=2).
    xb = jax.random.normal(k2, (1024, 2048), dtype=jnp.float32)
    outb = jax.block_until_ready(tudui_forward(xb))
    assert outb.shape == xb.shape
    assert jnp.allclose(outb, xb + 1.0)

    # Case 4: awkward shape not divisible by 128 -> fallback layout, full block.
    xo = jax.random.normal(k3, (33, 100), dtype=jnp.float32)
    outo = jax.block_until_ready(tudui_forward(xo))
    assert outo.shape == xo.shape
    assert jnp.allclose(outo, xo + 1.0)

    print("KERNEL_OK")
</pallas_src>

<mosaic_0001>
module attributes {stable_mosaic.version = 11 : i64} {
  func.func @_add_one_kernel(%arg0: i32, %arg1: memref<1x2048xf32, #tpu.memory_space<vmem>>, %arg2: memref<1x2048xf32, #tpu.memory_space<vmem>>) attributes {dimension_semantics = [#tpu.dimension_semantics<parallel>], iteration_bounds = array<i64: 1>, scalar_prefetch = 0 : i64, scratch_operands = 0 : i64, tpu.core_type = #tpu.core_type<tc>, window_params = [{transform_indices = @transform_0, window_bounds = array<i64: 1, 2048>}, {transform_indices = @transform_1, window_bounds = array<i64: 1, 2048>}]} {
    %c0 = arith.constant 0 : index
    %c0_0 = arith.constant 0 : index
    %0 = vector.load %arg1[%c0, %c0_0] : memref<1x2048xf32, #tpu.memory_space<vmem>>, vector<1x2048xf32>
    %cst = arith.constant 1.000000e+00 : f32
    %1 = vector.broadcast %cst : f32 to vector<1x2048xf32>
    %2 = arith.addf %0, %1 : vector<1x2048xf32>
    %c0_1 = arith.constant 0 : index
    %c0_2 = arith.constant 0 : index
    %3 = vector.load %arg2[%c0_1, %c0_2] : memref<1x2048xf32, #tpu.memory_space<vmem>>, vector<1x2048xf32>
    tpu.vector_store %arg2[%c0_1, %c0_2], %2 {strides = array<i32>} : memref<1x2048xf32, #tpu.memory_space<vmem>>, vector<1x2048xf32>,
    return
  }
  func.func @transform_0(%arg0: i32) -> (i32, i32) {
    %c0_i32 = arith.constant 0 : i32
    %c0_i32_0 = arith.constant 0 : i32
    return %arg0, %c0_i32 : i32, i32
  }
  func.func @transform_1(%arg0: i32) -> (i32, i32) {
    %c0_i32 = arith.constant 0 : i32
    %c0_i32_0 = arith.constant 0 : i32
    return %arg0, %c0_i32 : i32, i32
  }
}

</mosaic_0001>

<llo_original>
// kernel: tpu_custom_call.1
$region0: #{tpu_custom_call.1}
  #allocation0 [shape = 'u32[]', space=smem, size = 0x4, offset = 0x4, fixed_abs, tag = 'smem constant byte address 0x4 - core index']
  #allocation1 [shape = 'u32[144,128]{1,0:T(1,128)}', space=vmem, size = 0x12000, scoped, tag = 'internal scratch']
  %s0 = inlined_call_operand.hbm [shape: f32[1,2048], index: 0, kind: input, shape index: {}]
  %s1 = inlined_call_operand.hbm [shape: f32[1,2048], index: 1, kind: output, shape index: {}]
  %s2 = sld [smem:[#allocation0]]
  $region18: #{tpu_custom_call.1} parent=0
    _
  %s4 = ssub.s32 1, %s2
  %s5 = scalar_select 0, %s4, %s2
  $region1: #{tpu_custom_call.1} parent=0
    #allocation2 [shape = 'u8[8192]{0}', space=vmem, size = 0x2000, scoped, tag = 'input window, operand 0, single buffered']
    #allocation3 [shape = 's32[1]{0}', space=sflag, size = 0x4, scoped, tag = 'scoped memory for tpu_custom_call.1']
    #allocation4 [shape = 's32[1]{0}', space=sflag, size = 0x4, scoped, tag = 'scoped memory for tpu_custom_call.1']
    #allocation5 [shape = 'u8[8192]{0}', space=vmem, size = 0x2000, scoped, tag = 'output window, operand 0, single buffered']
    %6 = vsyncpa [#allocation3], 0
    %7 = vsyncpa [#allocation4], 0
    // Predicated region
    $region2: #{tpu_custom_call.1} parent=1 // pred_check
      _
    $region3: #{tpu_custom_call.1} parent=1 // pred_check_branch
      %9 = sbr.rel (0) target = $region5
    $region4: #{tpu_custom_call.1} parent=1 // pred_region
      %s11 = ssub.s32 256, 256
      %12 = vsyncadd [#allocation3], %s11
      %s14 = sshll.u32 [#allocation2], 4
      %s15 = int_to_ptr.vmem [resolvable:$true] %s14
      %17 = dma.hbm_to_vmem [thread:$0]  %s0, 256, %s15, [#allocation3]
    $region5: #{tpu_custom_call.1} parent=1 // pred_fallthru
      _
    // Predicated region
    $region6: #{tpu_custom_call.1} parent=1 // pred_check
      _
    $region7: #{tpu_custom_call.1} parent=1 // pred_check_branch
      %19 = sbr.rel (0) target = $region9
    $region8: #{tpu_custom_call.1} parent=1 // pred_region
      %20 = dma.done [#allocation3], 256
    $region9: #{tpu_custom_call.1} parent=1 // pred_fallthru
      _
    %v21 = vld [vmem:[#allocation2] sm:$0xff]
    %v22 = vld [vmem:[#allocation2 + $0x8] sm:$0xff]
    %v23 = vadd.f32 %v21, 1.0
    %v24 = vadd.f32 %v22, 1.0
    %25 = vst [vmem:[#allocation5] sm:$0xff] %v23
    %26 = vst [vmem:[#allocation5 + $0x8] sm:$0xff] %v24
    // Predicated region
    $region10: #{tpu_custom_call.1} parent=1 // pred_check
      _
    $region11: #{tpu_custom_call.1} parent=1 // pred_check_branch
      %28 = sbr.rel (0) target = $region13
    $region12: #{tpu_custom_call.1} parent=1 // pred_region
      %s30 = ssub.s32 256, 256
      %31 = vsyncadd [#allocation4], %s30
      %s33 = sshll.u32 [#allocation5], 4
      %s34 = int_to_ptr.vmem [resolvable:$true] %s33
      %36 = dma.vmem_to_hbm [thread:$0]  %s34, 256, %s1, [#allocation4]
    $region13: #{tpu_custom_call.1} parent=1 // pred_fallthru
      _
    // Predicated region
    $region14: #{tpu_custom_call.1} parent=1 // pred_check
      _
    $region15: #{tpu_custom_call.1} parent=1 // pred_check_branch
      %38 = sbr.rel (0) target = $region17
    $region16: #{tpu_custom_call.1} parent=1 // pred_region
      %39 = dma.done [#allocation4], 256
    $region17: #{tpu_custom_call.1} parent=1 // pred_fallthru
      _
    %40 = vsyncpa [#allocation3], 1
    %41 = vsyncpa [#allocation4], 1

</llo_original>
